<compile_context>
chip_gen: v7x
topology: tpu7x:2x2x1
jax: 0.10.0
libtpu: 0.0.40
codegen_flags: <defaults>
</compile_context>

<pallas_src>
import functools

import jax
import jax.numpy as jnp
from jax.experimental import pallas as pl
from jax.experimental.pallas import tpu as pltpu


NEG_SLOPE = 0.01  # torch.nn.LeakyReLU default


def _leaky_relu(x):
    return jnp.where(x > 0, x, NEG_SLOPE * x)


def _round_up(n, m):
    return ((n + m - 1) // m) * m


def regressor_kernel(x_ref, w1_ref, b1_ref, w2_ref, b2_ref, w3_ref, b3_ref,
                     o_ref):
    """One batch tile of the fused 3-layer MLP (eval mode).

    Matmul operand dtype follows the weight dtype passed by the wrapper
    (bf16 fast path / f32 exact path); accumulation is always f32 on the MXU.
    Biases are kept f32 and added to the f32 accumulator.
    """
    # Layer 1 (K=4).  Cast x to the weight dtype so the dot runs as a native
    # bf16 MXU matmul (no f32 emulation passes); the cast is ~4 elems/row.
    x = x_ref[...].astype(w1_ref.dtype)
    h = jnp.dot(x, w1_ref[...], preferred_element_type=jnp.float32)
    h = _leaky_relu(h + b1_ref[...])

    # TODO(synk): Dropout(p=0.5) is identity in eval mode; a training-mode
    # path would need a pltpu.prng_seed / pltpu.prng_random_bits mask plus
    # 1/(1-p) scaling.

    # Layer 2: cast activations once, immediately after bias+LeakyReLU.
    h = h.astype(w2_ref.dtype)
    h = jnp.dot(h, w2_ref[...], preferred_element_type=jnp.float32)
    h = _leaky_relu(h + b2_ref[...])

    # Layer 3.
    h = h.astype(w3_ref.dtype)
    o = jnp.dot(h, w3_ref[...], preferred_element_type=jnp.float32)
    o = o + b3_ref[...]

    o_ref[...] = o.astype(o_ref.dtype)


@functools.partial(
    jax.jit,
    static_argnames=("batch_tile", "use_bf16", "num_tensorcores", "out_dtype"))
def regressor_forward(x, params, batch_tile=512, use_bf16=True,
                      num_tensorcores=1, out_dtype=jnp.float32):
    """x: (B, 4) float32 -> (B, 384) out_dtype (default float32).

    num_tensorcores: set to 2 on v7x so multi-step grids get an even step
    count across both TensorCores; leave at 1 on v5e/v6e (single TC).
    """
    w1, b1, w2, b2, w3, b3 = params
    B, Din = x.shape
    Dout = w3.shape[1]

    # Cast weights ONCE in the wrapper (outside the grid loop).  Biases stay
    # f32: they are added to the f32 MXU accumulator.
    mm_dtype = jnp.bfloat16 if use_bf16 else jnp.float32
    w1, w2, w3 = (w.astype(mm_dtype) for w in (w1, w2, w3))

    # Sublane-aligned tile (multiple of 8), capped at the padded batch.
    tile = min(batch_tile, _round_up(B, 8))
    steps = pl.cdiv(B, tile)
    # v7x only: the "parallel" batch axis shards across TensorCores, so an
    # odd step count leaves one core idle on the last step.  Never force a
    # single-tile batch to split (that is pure overhead on 1-TC chips).
    if num_tensorcores > 1 and steps > 1 and steps % num_tensorcores != 0:
        steps = _round_up(steps, num_tensorcores)
        tile = _round_up(pl.cdiv(B, steps), 8)
        steps = pl.cdiv(B, tile)

    b_pad = steps * tile
    if b_pad != B:
        # Cheap wrapper-side pad (16 B/row) keeps every tile full so stores
        # stay unmasked and lane-dense; padded rows are sliced off below.
        x = jnp.pad(x, ((0, b_pad - B), (0, 0)))

    def x_map(i):
        return (i, 0)

    def const_map(i):
        # Constant block index => weights stay resident, no per-step re-DMA.
        return (0, 0)

    out = pl.pallas_call(
        regressor_kernel,
        out_shape=jax.ShapeDtypeStruct((b_pad, Dout), out_dtype),
        grid_spec=pltpu.PrefetchScalarGridSpec(
            num_scalar_prefetch=0,
            grid=(steps,),
            in_specs=[
                pl.BlockSpec((tile, Din), x_map),     # x tile       (tile, 4)
                pl.BlockSpec(w1.shape, const_map),    # W1           (4, 128)
                pl.BlockSpec(b1.shape, const_map),    # b1           (1, 128)
                pl.BlockSpec(w2.shape, const_map),    # W2           (128, 256)
                pl.BlockSpec(b2.shape, const_map),    # b2           (1, 256)
                pl.BlockSpec(w3.shape, const_map),    # W3           (256, 384)
                pl.BlockSpec(b3.shape, const_map),    # b3           (1, 384)
            ],
            out_specs=pl.BlockSpec((tile, Dout), x_map),  # (tile, 384) lane-dense
        ),
        compiler_params=pltpu.CompilerParams(
            dimension_semantics=("parallel",),
        ),
    )(x, w1, b1, w2, b2, w3, b3)

    return out[:B]


def init_params(key):
    """Deterministic init matching torch.nn.Linear default:
    U(-1/sqrt(fan_in), 1/sqrt(fan_in)) for weight and bias.
    Weights kept as (in, out)."""
    dims = [(4, 128), (128, 256), (256, 384)]
    params = []
    for (din, dout) in dims:
        key, kw, kb = jax.random.split(key, 3)
        bound = 1.0 / (din ** 0.5)
        w = jax.random.uniform(kw, (din, dout), jnp.float32, -bound, bound)
        b = jax.random.uniform(kb, (1, dout), jnp.float32, -bound, bound)
        params += [w, b]
    return tuple(params)


def reference_forward(x, params):
    """Plain-JAX reference (eval mode, dropout = identity)."""
    w1, b1, w2, b2, w3, b3 = params
    h = _leaky_relu(x @ w1 + b1)
    h = _leaky_relu(h @ w2 + b2)
    return h @ w3 + b3


if __name__ == "__main__":
    key = jax.random.PRNGKey(0)
    kx, kx2, kx3, kp = jax.random.split(key, 4)
    params = init_params(kp)

    # Small deterministic test: B=8 (tile == batch, grid of 1).
    B = 8
    x = jax.random.normal(kx, (B, 4), jnp.float32)
    ref = reference_forward(x, params)

    # Exact-path sanity check (f32 operands everywhere).
    out_f32 = jax.block_until_ready(regressor_forward(x, params, use_bf16=False))
    assert out_f32.shape == (B, 384), out_f32.shape
    assert jnp.allclose(out_f32, ref, atol=1e-4, rtol=1e-4), "f32 mismatch"

    # Default fast path: bf16 operands (pre-cast weights), f32 accumulation.
    out_bf16 = jax.block_until_ready(regressor_forward(x, params))
    assert out_bf16.shape == (B, 384), out_bf16.shape
    assert jnp.allclose(out_bf16, ref, atol=2e-2, rtol=2e-2), "bf16 mismatch"

    # Ragged-batch path (B=9 -> padded to one full tile, then sliced back).
    B2 = 9
    x2 = jax.random.normal(kx2, (B2, 4), jnp.float32)
    out2 = jax.block_until_ready(regressor_forward(x2, params))
    ref2 = reference_forward(x2, params)
    assert out2.shape == (B2, 384), out2.shape
    assert jnp.allclose(out2, ref2, atol=2e-2, rtol=2e-2), "padded-batch mismatch"

    # Multi-step grid path (B=1000, batch_tile=512 -> 2 steps, padded to 1024).
    B3 = 1000
    x3 = jax.random.normal(kx3, (B3, 4), jnp.float32)
    out3 = jax.block_until_ready(regressor_forward(x3, params))
    ref3 = reference_forward(x3, params)
    assert out3.shape == (B3, 384), out3.shape
    assert jnp.allclose(out3, ref3, atol=2e-2, rtol=2e-2), "multi-step mismatch"

    print("KERNEL_OK")
</pallas_src>

<mosaic_0001>
module attributes {stable_mosaic.version = 11 : i64} {
  func.func @regressor_kernel(%arg0: i32, %arg1: memref<8x4xf32, #tpu.memory_space<vmem>>, %arg2: memref<4x128xf32, #tpu.memory_space<vmem>>, %arg3: memref<1x128xf32, #tpu.memory_space<vmem>>, %arg4: memref<128x256xf32, #tpu.memory_space<vmem>>, %arg5: memref<1x256xf32, #tpu.memory_space<vmem>>, %arg6: memref<256x384xf32, #tpu.memory_space<vmem>>, %arg7: memref<1x384xf32, #tpu.memory_space<vmem>>, %arg8: memref<8x384xf32, #tpu.memory_space<vmem>>) attributes {dimension_semantics = [#tpu.dimension_semantics<parallel>], iteration_bounds = array<i64: 1>, scalar_prefetch = 0 : i64, scratch_operands = 0 : i64, tpu.core_type = #tpu.core_type<tc>, window_params = [{transform_indices = @transform_0, window_bounds = array<i64: 8, 4>}, {pipeline_mode = #tpu.pipeline_mode<synchronous>, transform_indices = @transform_1, window_bounds = array<i64: 4, 128>}, {pipeline_mode = #tpu.pipeline_mode<synchronous>, transform_indices = @transform_2, window_bounds = array<i64: 1, 128>}, {pipeline_mode = #tpu.pipeline_mode<synchronous>, transform_indices = @transform_3, window_bounds = array<i64: 128, 256>}, {pipeline_mode = #tpu.pipeline_mode<synchronous>, transform_indices = @transform_4, window_bounds = array<i64: 1, 256>}, {pipeline_mode = #tpu.pipeline_mode<synchronous>, transform_indices = @transform_5, window_bounds = array<i64: 256, 384>}, {pipeline_mode = #tpu.pipeline_mode<synchronous>, transform_indices = @transform_6, window_bounds = array<i64: 1, 384>}, {transform_indices = @transform_7, window_bounds = array<i64: 8, 384>}]} {
    %c0 = arith.constant 0 : index
    %c0_0 = arith.constant 0 : index
    %0 = vector.load %arg1[%c0, %c0_0] : memref<8x4xf32, #tpu.memory_space<vmem>>, vector<8x4xf32>
    %c0_1 = arith.constant 0 : index
    %c0_2 = arith.constant 0 : index
    %1 = vector.load %arg2[%c0_1, %c0_2] : memref<4x128xf32, #tpu.memory_space<vmem>>, vector<4x128xf32>
    %cst = arith.constant dense<0.000000e+00> : vector<8x128xf32>
    %2 = tpu.matmul %0, %1, %cst {dimension_numbers = #tpu.dot_dimension_numbers<[1], [0], [0], [1], [0, 0, 1, 1], [], []>} : vector<8x4xf32>, vector<4x128xf32>, vector<8x128xf32> -> vector<8x128xf32>
    %c0_3 = arith.constant 0 : index
    %c0_4 = arith.constant 0 : index
    %3 = vector.load %arg3[%c0_3, %c0_4] : memref<1x128xf32, #tpu.memory_space<vmem>>, vector<1x128xf32>
    %4 = vector.broadcast %3 : vector<1x128xf32> to vector<8x128xf32>
    %5 = arith.addf %2, %4 : vector<8x128xf32>
    %cst_5 = arith.constant 0.000000e+00 : f32
    %6 = vector.broadcast %cst_5 : f32 to vector<8x128xf32>
    %7 = arith.cmpf ogt, %5, %6 : vector<8x128xf32>
    %cst_6 = arith.constant 0.00999999977 : f32
    %8 = vector.broadcast %cst_6 : f32 to vector<8x128xf32>
    %9 = arith.mulf %8, %5 : vector<8x128xf32>
    %10 = arith.select %7, %5, %9 : vector<8x128xi1>, vector<8x128xf32>
    %c0_7 = arith.constant 0 : index
    %c0_8 = arith.constant 0 : index
    %11 = vector.load %arg4[%c0_7, %c0_8] : memref<128x256xf32, #tpu.memory_space<vmem>>, vector<128x256xf32>
    %cst_9 = arith.constant dense<0.000000e+00> : vector<8x256xf32>
    %12 = tpu.matmul %10, %11, %cst_9 {dimension_numbers = #tpu.dot_dimension_numbers<[1], [0], [0], [1], [0, 0, 1, 1], [], []>} : vector<8x128xf32>, vector<128x256xf32>, vector<8x256xf32> -> vector<8x256xf32>
    %c0_10 = arith.constant 0 : index
    %c0_11 = arith.constant 0 : index
    %13 = vector.load %arg5[%c0_10, %c0_11] : memref<1x256xf32, #tpu.memory_space<vmem>>, vector<1x256xf32>
    %14 = vector.broadcast %13 : vector<1x256xf32> to vector<8x256xf32>
    %15 = arith.addf %12, %14 : vector<8x256xf32>
    %cst_12 = arith.constant 0.000000e+00 : f32
    %16 = vector.broadcast %cst_12 : f32 to vector<8x256xf32>
    %17 = arith.cmpf ogt, %15, %16 : vector<8x256xf32>
    %cst_13 = arith.constant 0.00999999977 : f32
    %18 = vector.broadcast %cst_13 : f32 to vector<8x256xf32>
    %19 = arith.mulf %18, %15 : vector<8x256xf32>
    %20 = arith.select %17, %15, %19 : vector<8x256xi1>, vector<8x256xf32>
    %c0_14 = arith.constant 0 : index
    %c0_15 = arith.constant 0 : index
    %21 = vector.load %arg6[%c0_14, %c0_15] : memref<256x384xf32, #tpu.memory_space<vmem>>, vector<256x384xf32>
    %cst_16 = arith.constant dense<0.000000e+00> : vector<8x384xf32>
    %22 = tpu.matmul %20, %21, %cst_16 {dimension_numbers = #tpu.dot_dimension_numbers<[1], [0], [0], [1], [0, 0, 1, 1], [], []>} : vector<8x256xf32>, vector<256x384xf32>, vector<8x384xf32> -> vector<8x384xf32>
    %c0_17 = arith.constant 0 : index
    %c0_18 = arith.constant 0 : index
    %23 = vector.load %arg7[%c0_17, %c0_18] : memref<1x384xf32, #tpu.memory_space<vmem>>, vector<1x384xf32>
    %24 = vector.broadcast %23 : vector<1x384xf32> to vector<8x384xf32>
    %25 = arith.addf %22, %24 : vector<8x384xf32>
    %c0_19 = arith.constant 0 : index
    %c0_20 = arith.constant 0 : index
    %26 = vector.load %arg8[%c0_19, %c0_20] : memref<8x384xf32, #tpu.memory_space<vmem>>, vector<8x384xf32>
    tpu.vector_store %arg8[%c0_19, %c0_20], %25 {strides = array<i32>} : memref<8x384xf32, #tpu.memory_space<vmem>>, vector<8x384xf32>,
    return
  }
  func.func @transform_0(%arg0: i32) -> (i32, i32) {
    %c0_i32 = arith.constant 0 : i32
    %c0_i32_0 = arith.constant 0 : i32
    return %arg0, %c0_i32 : i32, i32
  }
  func.func @transform_1(%arg0: i32) -> (i32, i32) {
    %c0_i32 = arith.constant 0 : i32
    %c0_i32_0 = arith.constant 0 : i32
    %c0_i32_1 = arith.constant 0 : i32
    return %c0_i32, %c0_i32_0 : i32, i32
  }
  func.func @transform_2(%arg0: i32) -> (i32, i32) {
    %c0_i32 = arith.constant 0 : i32
    %c0_i32_0 = arith.constant 0 : i32
    %c0_i32_1 = arith.constant 0 : i32
    return %c0_i32, %c0_i32_0 : i32, i32
  }
  func.func @transform_3(%arg0: i32) -> (i32, i32) {
    %c0_i32 = arith.constant 0 : i32
    %c0_i32_0 = arith.constant 0 : i32
    %c0_i32_1 = arith.constant 0 : i32
    return %c0_i32, %c0_i32_0 : i32, i32
  }
  func.func @transform_4(%arg0: i32) -> (i32, i32) {
    %c0_i32 = arith.constant 0 : i32
    %c0_i32_0 = arith.constant 0 : i32
    %c0_i32_1 = arith.constant 0 : i32
    return %c0_i32, %c0_i32_0 : i32, i32
  }
  func.func @transform_5(%arg0: i32) -> (i32, i32) {
    %c0_i32 = arith.constant 0 : i32
    %c0_i32_0 = arith.constant 0 : i32
    %c0_i32_1 = arith.constant 0 : i32
    return %c0_i32, %c0_i32_0 : i32, i32
  }
  func.func @transform_6(%arg0: i32) -> (i32, i32) {
    %c0_i32 = arith.constant 0 : i32
    %c0_i32_0 = arith.constant 0 : i32
    %c0_i32_1 = arith.constant 0 : i32
    return %c0_i32, %c0_i32_0 : i32, i32
  }
  func.func @transform_7(%arg0: i32) -> (i32, i32) {
    %c0_i32 = arith.constant 0 : i32
    %c0_i32_0 = arith.constant 0 : i32
    return %arg0, %c0_i32 : i32, i32
  }
}

</mosaic_0001>

<llo_original>
// kernel: regressor_forward.1
$region0: #{regressor_forward.1}
  #allocation0 [shape = 'u32[]', space=smem, size = 0x4, offset = 0x4, fixed_abs, tag = 'smem constant byte address 0x4 - core index']
  #allocation1 [shape = 'u32[144,128]{1,0:T(1,128)}', space=vmem, size = 0x12000, scoped, tag = 'internal scratch']
  %s0 = inlined_call_operand.vmem [shape: f32[8,4], index: 0, kind: input, shape index: {}]
  %s1 = inlined_call_operand.vmem [shape: f32[4,128], index: 1, kind: input, shape index: {}]
  %s2 = inlined_call_operand.vmem [shape: f32[1,128], index: 2, kind: input, shape index: {}]
  %s3 = inlined_call_operand.hbm [shape: f32[128,256], index: 3, kind: input, shape index: {}]
  %s4 = inlined_call_operand.vmem [shape: f32[1,256], index: 4, kind: input, shape index: {}]
  %s5 = inlined_call_operand.hbm [shape: f32[256,384], index: 5, kind: input, shape index: {}]
  %s6 = inlined_call_operand.vmem [shape: f32[1,384], index: 6, kind: input, shape index: {}]
  %s7 = inlined_call_operand.hbm [shape: f32[8,384], index: 7, kind: output, shape index: {}]
  %s8 = sld [smem:[#allocation0]]
  $region46: #{regressor_forward.1} parent=0
    _
  %s10 = ssub.s32 1, %s8
  %s11 = scalar_select 0, %s10, %s8
  $region1: #{regressor_forward.1} parent=0
    #allocation2 [shape = 'u8[131072]{0}', space=vmem, size = 0x20000, scoped, tag = 'input window, operand 3, single buffered']
    #allocation3 [shape = 's32[1]{0}', space=sflag, size = 0x4, scoped, tag = 'scoped memory for regressor_forward.1']
    #allocation4 [shape = 's32[1]{0}', space=sflag, size = 0x4, scoped, tag = 'scoped memory for regressor_forward.1']
    #allocation5 [shape = 'u8[393216]{0}', space=vmem, size = 0x60000, scoped, tag = 'input window, operand 5, single buffered']
    #allocation6 [shape = 's32[1]{0}', space=sflag, size = 0x4, scoped, tag = 'scoped memory for regressor_forward.1']
    #allocation7 [shape = 'u8[12288]{0}', space=vmem, size = 0x3000, scoped, tag = 'output window, operand 0, single buffered']
    %12 = vsyncpa [#allocation3], 0
    %13 = vsyncpa [#allocation6], 0
    %14 = vsyncpa [#allocation4], 0
    // Predicated region
    $region2: #{regressor_forward.1} parent=1 // pred_check
      _
    $region3: #{regressor_forward.1} parent=1 // pred_check_branch
      %16 = sbr.rel (0) target = $region5
    $region4: #{regressor_forward.1} parent=1 // pred_region
      _
    $region5: #{regressor_forward.1} parent=1 // pred_fallthru
      _
    // Predicated region
    $region6: #{regressor_forward.1} parent=1 // pred_check
      _
    $region7: #{regressor_forward.1} parent=1 // pred_check_branch
      %18 = sbr.rel (0) target = $region9
    $region8: #{regressor_forward.1} parent=1 // pred_region
      _
    $region9: #{regressor_forward.1} parent=1 // pred_fallthru
      _
    // Predicated region
    $region10: #{regressor_forward.1} parent=1 // pred_check
      _
    $region11: #{regressor_forward.1} parent=1 // pred_check_branch
      %20 = sbr.rel (0) target = $region13
    $region12: #{regressor_forward.1} parent=1 // pred_region
      _
    $region13: #{regressor_forward.1} parent=1 // pred_fallthru
      _
    // Predicated region
    $region14: #{regressor_forward.1} parent=1 // pred_check
      _
    $region15: #{regressor_forward.1} parent=1 // pred_check_branch
      %22 = sbr.rel (0) target = $region17
    $region16: #{regressor_forward.1} parent=1 // pred_region
      %s24 = ssub.s32 4096, 4096
      %25 = vsyncadd [#allocation3], %s24
      %s26 = sshll.u32 [#allocation2], 4
      %s27 = int_to_ptr.vmem [resolvable:$true] %s26
      %32 = dma.hbm_to_vmem [thread:$0]  %s3, 4096, %s27, [#allocation3], 256, 256, 16
    $region17: #{regressor_forward.1} parent=1 // pred_fallthru
      _
    // Predicated region
    $region18: #{regressor_forward.1} parent=1 // pred_check
      _
    $region19: #{regressor_forward.1} parent=1 // pred_check_branch
      %34 = sbr.rel (0) target = $region21
    $region20: #{regressor_forward.1} parent=1 // pred_region
      _
    $region21: #{regressor_forward.1} parent=1 // pred_fallthru
      _
    // Predicated region
    $region22: #{regressor_forward.1} parent=1 // pred_check
      _
    $region23: #{regressor_forward.1} parent=1 // pred_check_branch
      %36 = sbr.rel (0) target = $region25
    $region24: #{regressor_forward.1} parent=1 // pred_region
      %s38 = ssub.s32 12288, 12288
      %39 = vsyncadd [#allocation6], %s38
      %s40 = sshll.u32 [#allocation5], 4
      %s41 = int_to_ptr.vmem [resolvable:$true] %s40
      %46 = dma.hbm_to_vmem [thread:$0]  %s5, 12288, %s41, [#allocation6], 384, 384, 24
    $region25: #{regressor_forward.1} parent=1 // pred_fallthru
      _
    // Predicated region
    $region26: #{regressor_forward.1} parent=1 // pred_check
      _
    $region27: #{regressor_forward.1} parent=1 // pred_check_branch
      %48 = sbr.rel (0) target = $region29
    $region28: #{regressor_forward.1} parent=1 // pred_region
      _
    $region29: #{regressor_forward.1} parent=1 // pred_fallthru
      _
    // Predicated region
    $region30: #{regressor_forward.1} parent=1 // pred_check
      _
    $region31: #{regressor_forward.1} parent=1 // pred_check_branch
      %50 = sbr.rel (0) target = $region33
    $region32: #{regressor_forward.1} parent=1 // pred_region
      %51 = dma.done [#allocation3], 4096
    $region33: #{regressor_forward.1} parent=1 // pred_fallthru
      _
    // Predicated region
    $region34: #{regressor_forward.1} parent=1 // pred_check
      _
    $region35: #{regressor_forward.1} parent=1 // pred_check_branch
      %53 = sbr.rel (0) target = $region37
    $region36: #{regressor_forward.1} parent=1 // pred_region
      %54 = dma.done [#allocation6], 12288
    $region37: #{regressor_forward.1} parent=1 // pred_fallthru
      _
    %v55 = vld [vmem:[%s0] sm:$0xff]
    %v56 = vld [vmem:[%s1] sm:$0xf]
    %v57 = vld [vmem:[%s2] sm:$0x1]
    %v59 = vlaneseq
    %v60 = vshrl.u32 %v59, 7
    %v61 = vsub.s32 0, %v60
    %v62 = vrot.slane %v57, %v61
    %vm64 = vcmask 31744
    %v66 = vsel %vm64, %v55, 0
    %vm68 = vcmask 1043456
    %v70 = vsel %vm68, %v56, 0
    %72 = vmatprep.subr.mxu0 0.0
    %73 = vmatpush1.msra.mxu0 %v70
    %74 = vmatprep.subr.mxu0 0.0
    %75 = vmatpush1.msra.mxu0 0.0
    %76 = vmatprep.subr.mxu0 0.0
    %77 = vmatpush1.msra.mxu0 0.0
    %78 = vmatprep.subr.mxu0 0.0
    %79 = vmatpush1.msra.mxu0 0.0
    %80 = vmatprep.subr.mxu0 0.0
    %81 = vmatpush1.msra.mxu0 0.0
    %82 = vmatprep.subr.mxu0 0.0
    %83 = vmatpush1.msra.mxu0 0.0
    %84 = vmatprep.subr.mxu0 0.0
    %85 = vmatpush1.msra.mxu0 0.0
    %86 = vmatprep.subr.mxu0 0.0
    %87 = vmatpush1.msra.mxu0 0.0
    %88 = vmatprep.subr.mxu0 0.0
    %89 = vmatpush1.msra.mxu0 0.0
    %90 = vmatprep.subr.mxu0 0.0
    %91 = vmatpush1.msra.mxu0 0.0
    %92 = vmatprep.subr.mxu0 0.0
    %93 = vmatpush1.msra.mxu0 0.0
    %94 = vmatprep.subr.mxu0 0.0
    %95 = vmatpush1.msra.mxu0 0.0
    %96 = vmatprep.subr.mxu0 0.0
    %97 = vmatpush1.msra.mxu0 0.0
    %98 = vmatprep.subr.mxu0 0.0
    %99 = vmatpush1.msra.mxu0 0.0
    %100 = vmatprep.subr.mxu0 0.0
    %101 = vmatpush1.msra.mxu0 0.0
    %102 = vmatprep.subr.mxu0 0.0
    %103 = vmatpush1.msra.mxu0 0.0
    %104 = vmatprep.subr.mxu0 0.0
    %105 = vmatpush1.msra.mxu0 0.0
    %106 = vmatprep.subr.mxu0 0.0
    %107 = vmatpush1.msra.mxu0 0.0
    %108 = vmatprep.subr.mxu0 0.0
    %109 = vmatpush1.msra.mxu0 0.0
    %110 = vmatprep.subr.mxu0 0.0
    %111 = vmatpush1.msra.mxu0 0.0
    %112 = vmatprep.subr.mxu0 0.0
    %113 = vmatpush1.msra.mxu0 0.0
    %114 = vmatprep.subr.mxu0 0.0
    %115 = vmatpush1.msra.mxu0 0.0
    %116 = vmatprep.subr.mxu0 0.0
    %117 = vmatpush1.msra.mxu0 0.0
    %118 = vmatprep.subr.mxu0 0.0
    %119 = vmatpush1.msra.mxu0 0.0
    %120 = vmatprep.subr.mxu0 0.0
    %121 = vmatpush1.msra.mxu0 0.0
    %122 = vmatprep.subr.mxu0 0.0
    %123 = vmatpush1.msra.mxu0 0.0
    %124 = vmatprep.subr.mxu0 0.0
    %125 = vmatpush1.msra.mxu0 0.0
    %126 = vmatprep.subr.mxu0 0.0
    %127 = vmatpush1.msra.mxu0 0.0
    %128 = vmatprep.subr.mxu0 0.0
    %129 = vmatpush1.msra.mxu0 0.0
    %130 = vmatprep.subr.mxu0 0.0
    %131 = vmatpush1.msra.mxu0 0.0
    %132 = vmatprep.subr.mxu0 0.0
    %133 = vmatpush1.msra.mxu0 0.0
    %134 = vmatprep.subr.mxu0 0.0
    %135 = vmatpush1.msra.mxu0 0.0
    %136 = vmatprep.mubr.f32.mxu0 0.0
    %137 = vmatmul.mubr.f32.gmra.mrb[0].mxu0 %v66
    %v138 = vpop.f32.mrb[0].mxu0
    %v139 = vadd.f32 %v62, %v138
    %v140 = vpop.f32.mrb[0].mxu0
    %141 = vdwg.mxu0
    %vm142 = vcmp.gt.f32.partialorder %v139, 0.0
    %v143 = vmul.f32 %v139, 0.01
    %v144 = vsel %vm142, %v139, %v143
    %v145 = vld [vmem:[#allocation2] sm:$0xff]
    %v146 = vld [vmem:[#allocation2 + $0x8] sm:$0xff]
    %v147 = vld [vmem:[#allocation2 + $0x10] sm:$0xff]
    %v148 = vld [vmem:[#allocation2 + $0x18] sm:$0xff]
    %v149 = vld [vmem:[#allocation2 + $0x20] sm:$0xff]
    %v150 = vld [vmem:[#allocation2 + $0x28] sm:$0xff]
    %v151 = vld [vmem:[#allocation2 + $0x30] sm:$0xff]
    %v152 = vld [vmem:[#allocation2 + $0x38] sm:$0xff]
    %v153 = vld [vmem:[#allocation2 + $0x40] sm:$0xff]
    %v154 = vld [vmem:[#allocation2 + $0x48] sm:$0xff]
    %v155 = vld [vmem:[#allocation2 + $0x50] sm:$0xff]
    %v156 = vld [vmem:[#allocation2 + $0x58] sm:$0xff]
    %v157 = vld [vmem:[#allocation2 + $0x60] sm:$0xff]
    %v158 = vld [vmem:[#allocation2 + $0x68] sm:$0xff]
    %v159 = vld [vmem:[#allocation2 + $0x70] sm:$0xff]
    %v160 = vld [vmem:[#allocation2 + $0x78] sm:$0xff]
    %v161 = vld [vmem:[#allocation2 + $0x80] sm:$0xff]
    %v162 = vld [vmem:[#allocation2 + $0x88] sm:$0xff]
    %v163 = vld [vmem:[#allocation2 + $0x90] sm:$0xff]
    %v164 = vld [vmem:[#allocation2 + $0x98] sm:$0xff]
    %v165 = vld [vmem:[#allocation2 + $0xa0] sm:$0xff]
    %v166 = vld [vmem:[#allocation2 + $0xa8] sm:$0xff]
    %v167 = vld [vmem:[#allocation2 + $0xb0] sm:$0xff]
    %v168 = vld [vmem:[#allocation2 + $0xb8] sm:$0xff]
    %v169 = vld [vmem:[#allocation2 + $0xc0] sm:$0xff]
    %v170 = vld [vmem:[#allocation2 + $0xc8] sm:$0xff]
    %v171 = vld [vmem:[#allocation2 + $0xd0] sm:$0xff]
    %v172 = vld [vmem:[#allocation2 + $0xd8] sm:$0xff]
    %v173 = vld [vmem:[#allocation2 + $0xe0] sm:$0xff]
    %v174 = vld [vmem:[#allocation2 + $0xe8] sm:$0xff]
    %v175 = vld [vmem:[#allocation2 + $0xf0] sm:$0xff]
    %v176 = vld [vmem:[#allocation2 + $0xf8] sm:$0xff]
    %v177 = vld [vmem:[%s4] sm:$0x3]
    %v179 = vlaneseq
    %v180 = vshrl.u32 %v179, 7
    %v181 = vsub.s32 0, %v180
    %v182 = vrot.slane %v177, %v181
    %v183 = vlaneseq
    %v184 = vshrl.u32 %v183, 7
    %v185 = vsub.s32 1, %v184
    %v186 = vrot.slane %v177, %v185
    %189 = vmatprep.subr.mxu0 %v146
    %190 = vmatpush1.msra.mxu0 %v145
    %191 = vmatprep.subr.mxu0 %v148
    %192 = vmatpush1.msra.mxu0 %v147
    %193 = vmatprep.subr.mxu0 %v150
    %194 = vmatpush1.msra.mxu0 %v149
    %195 = vmatprep.subr.mxu0 %v152
    %196 = vmatpush1.msra.mxu0 %v151
    %197 = vmatprep.subr.mxu0 %v154
    %198 = vmatpush1.msra.mxu0 %v153
    %199 = vmatprep.subr.mxu0 %v156
    %200 = vmatpush1.msra.mxu0 %v155
    %201 = vmatprep.subr.mxu0 %v158
    %202 = vmatpush1.msra.mxu0 %v157
    %203 = vmatprep.subr.mxu0 %v160
    %204 = vmatpush1.msra.mxu0 %v159
    %205 = vmatprep.subr.mxu0 %v162
    %206 = vmatpush1.msra.mxu0 %v161
    %207 = vmatprep.subr.mxu0 %v164
    %208 = vmatpush1.msra.mxu0 %v163
    %209 = vmatprep.subr.mxu0 %v166
    %210 = vmatpush1.msra.mxu0 %v165
    %211 = vmatprep.subr.mxu0 %v168
    %212 = vmatpush1.msra.mxu0 %v167
    %213 = vmatprep.subr.mxu0 %v170
    %214 = vmatpush1.msra.mxu0 %v169
    %215 = vmatprep.subr.mxu0 %v172
    %216 = vmatpush1.msra.mxu0 %v171
    %217 = vmatprep.subr.mxu0 %v174
    %218 = vmatpush1.msra.mxu0 %v173
    %219 = vmatprep.subr.mxu0 %v176
    %220 = vmatpush1.msra.mxu0 %v175
    %221 = vmatprep.subr.mxu0 0.0
    %222 = vmatpush1.msra.mxu0 0.0
    %223 = vmatprep.subr.mxu0 0.0
    %224 = vmatpush1.msra.mxu0 0.0
    %225 = vmatprep.subr.mxu0 0.0
    %226 = vmatpush1.msra.mxu0 0.0
    %227 = vmatprep.subr.mxu0 0.0
    %228 = vmatpush1.msra.mxu0 0.0
    %229 = vmatprep.subr.mxu0 0.0
    %230 = vmatpush1.msra.mxu0 0.0
    %231 = vmatprep.subr.mxu0 0.0
    %232 = vmatpush1.msra.mxu0 0.0
    %233 = vmatprep.subr.mxu0 0.0
    %234 = vmatpush1.msra.mxu0 0.0
    %235 = vmatprep.subr.mxu0 0.0
    %236 = vmatpush1.msra.mxu0 0.0
    %237 = vmatprep.subr.mxu0 0.0
    %238 = vmatpush1.msra.mxu0 0.0
    %239 = vmatprep.subr.mxu0 0.0
    %240 = vmatpush1.msra.mxu0 0.0
    %241 = vmatprep.subr.mxu0 0.0
    %242 = vmatpush1.msra.mxu0 0.0
    %243 = vmatprep.subr.mxu0 0.0
    %244 = vmatpush1.msra.mxu0 0.0
    %245 = vmatprep.subr.mxu0 0.0
    %246 = vmatpush1.msra.mxu0 0.0
    %247 = vmatprep.subr.mxu0 0.0
    %248 = vmatpush1.msra.mxu0 0.0
    %249 = vmatprep.subr.mxu0 0.0
    %250 = vmatpush1.msra.mxu0 0.0
    %251 = vmatprep.subr.mxu0 0.0
    %252 = vmatpush1.msra.mxu0 0.0
    %253 = vmatprep.mubr.f32.mxu0 0.0
    %254 = vmatmul.mubr.f32.gmra.mrb[0].mxu0 %v144
    %v255 = vpop.f32.mrb[0].mxu0
    %v256 = vadd.f32 %v182, %v255
    %v257 = vpop.f32.mrb[0].mxu0
    %v258 = vadd.f32 %v186, %v257
    %259 = vdwg.mxu0
    %vm260 = vcmp.gt.f32.partialorder %v256, 0.0
    %vm261 = vcmp.gt.f32.partialorder %v258, 0.0
    %v262 = vmul.f32 %v256, 0.01
    %v263 = vmul.f32 %v258, 0.01
    %v264 = vsel %vm260, %v256, %v262
    %v265 = vsel %vm261, %v258, %v263
    %v266 = vld [vmem:[#allocation5] sm:$0xff]
    %v267 = vld [vmem:[#allocation5 + $0x8] sm:$0xff]
    %v268 = vld [vmem:[#allocation5 + $0x10] sm:$0xff]
    %v269 = vld [vmem:[#allocation5 + $0x18] sm:$0xff]
    %v270 = vld [vmem:[#allocation5 + $0x20] sm:$0xff]
    %v271 = vld [vmem:[#allocation5 + $0x28] sm:$0xff]
    %v272 = vld [vmem:[#allocation5 + $0x30] sm:$0xff]
    %v273 = vld [vmem:[#allocation5 + $0x38] sm:$0xff]
    %v274 = vld [vmem:[#allocation5 + $0x40] sm:$0xff]
    %v275 = vld [vmem:[#allocation5 + $0x48] sm:$0xff]
    %v276 = vld [vmem:[#allocation5 + $0x50] sm:$0xff]
    %v277 = vld [vmem:[#allocation5 + $0x58] sm:$0xff]
    %v278 = vld [vmem:[#allocation5 + $0x60] sm:$0xff]
    %v279 = vld [vmem:[#allocation5 + $0x68] sm:$0xff]
    %v280 = vld [vmem:[#allocation5 + $0x70] sm:$0xff]
    %v281 = vld [vmem:[#allocation5 + $0x78] sm:$0xff]
    %v282 = vld [vmem:[#allocation5 + $0x80] sm:$0xff]
    %v283 = vld [vmem:[#allocation5 + $0x88] sm:$0xff]
    %v284 = vld [vmem:[#allocation5 + $0x90] sm:$0xff]
    %v285 = vld [vmem:[#allocation5 + $0x98] sm:$0xff]
    %v286 = vld [vmem:[#allocation5 + $0xa0] sm:$0xff]
    %v287 = vld [vmem:[#allocation5 + $0xa8] sm:$0xff]
    %v288 = vld [vmem:[#allocation5 + $0xb0] sm:$0xff]
    %v289 = vld [vmem:[#allocation5 + $0xb8] sm:$0xff]
    %v290 = vld [vmem:[#allocation5 + $0xc0] sm:$0xff]
    %v291 = vld [vmem:[#allocation5 + $0xc8] sm:$0xff]
    %v292 = vld [vmem:[#allocation5 + $0xd0] sm:$0xff]
    %v293 = vld [vmem:[#allocation5 + $0xd8] sm:$0xff]
    %v294 = vld [vmem:[#allocation5 + $0xe0] sm:$0xff]
    %v295 = vld [vmem:[#allocation5 + $0xe8] sm:$0xff]
    %v296 = vld [vmem:[#allocation5 + $0xf0] sm:$0xff]
    %v297 = vld [vmem:[#allocation5 + $0xf8] sm:$0xff]
    %v298 = vld [vmem:[#allocation5 + $0x100] sm:$0xff]
    %v299 = vld [vmem:[#allocation5 + $0x108] sm:$0xff]
    %v300 = vld [vmem:[#allocation5 + $0x110] sm:$0xff]
    %v301 = vld [vmem:[#allocation5 + $0x118] sm:$0xff]
    %v302 = vld [vmem:[#allocation5 + $0x120] sm:$0xff]
    %v303 = vld [vmem:[#allocation5 + $0x128] sm:$0xff]
    %v304 = vld [vmem:[#allocation5 + $0x130] sm:$0xff]
    %v305 = vld [vmem:[#allocation5 + $0x138] sm:$0xff]
    %v306 = vld [vmem:[#allocation5 + $0x140] sm:$0xff]
    %v307 = vld [vmem:[#allocation5 + $0x148] sm:$0xff]
    %v308 = vld [vmem:[#allocation5 + $0x150] sm:$0xff]
    %v309 = vld [vmem:[#allocation5 + $0x158] sm:$0xff]
    %v310 = vld [vmem:[#allocation5 + $0x160] sm:$0xff]
    %v311 = vld [vmem:[#allocation5 + $0x168] sm:$0xff]
    %v312 = vld [vmem:[#allocation5 + $0x170] sm:$0xff]
    %v313 = vld [vmem:[#allocation5 + $0x178] sm:$0xff]
    %v314 = vld [vmem:[#allocation5 + $0x180] sm:$0xff]
    %v315 = vld [vmem:[#allocation5 + $0x188] sm:$0xff]
    %v316 = vld [vmem:[#allocation5 + $0x190] sm:$0xff]
    %v317 = vld [vmem:[#allocation5 + $0x198] sm:$0xff]
    %v318 = vld [vmem:[#allocation5 + $0x1a0] sm:$0xff]
    %v319 = vld [vmem:[#allocation5 + $0x1a8] sm:$0xff]
    %v320 = vld [vmem:[#allocation5 + $0x1b0] sm:$0xff]
    %v321 = vld [vmem:[#allocation5 + $0x1b8] sm:$0xff]
    %v322 = vld [vmem:[#allocation5 + $0x1c0] sm:$0xff]
    %v323 = vld [vmem:[#allocation5 + $0x1c8] sm:$0xff]
    %v324 = vld [vmem:[#allocation5 + $0x1d0] sm:$0xff]
    %v325 = vld [vmem:[#allocation5 + $0x1d8] sm:$0xff]
    %v326 = vld [vmem:[#allocation5 + $0x1e0] sm:$0xff]
    %v327 = vld [vmem:[#allocation5 + $0x1e8] sm:$0xff]
    %v328 = vld [vmem:[#allocation5 + $0x1f0] sm:$0xff]
    %v329 = vld [vmem:[#allocation5 + $0x1f8] sm:$0xff]
    %v330 = vld [vmem:[#allocation5 + $0x200] sm:$0xff]
    %v331 = vld [vmem:[#allocation5 + $0x208] sm:$0xff]
    %v332 = vld [vmem:[#allocation5 + $0x210] sm:$0xff]
    %v333 = vld [vmem:[#allocation5 + $0x218] sm:$0xff]
    %v334 = vld [vmem:[#allocation5 + $0x220] sm:$0xff]
    %v335 = vld [vmem:[#allocation5 + $0x228] sm:$0xff]
    %v336 = vld [vmem:[#allocation5 + $0x230] sm:$0xff]
    %v337 = vld [vmem:[#allocation5 + $0x238] sm:$0xff]
    %v338 = vld [vmem:[#allocation5 + $0x240] sm:$0xff]
    %v339 = vld [vmem:[#allocation5 + $0x248] sm:$0xff]
    %v340 = vld [vmem:[#allocation5 + $0x250] sm:$0xff]
    %v341 = vld [vmem:[#allocation5 + $0x258] sm:$0xff]
    %v342 = vld [vmem:[#allocation5 + $0x260] sm:$0xff]
    %v343 = vld [vmem:[#allocation5 + $0x268] sm:$0xff]
    %v344 = vld [vmem:[#allocation5 + $0x270] sm:$0xff]
    %v345 = vld [vmem:[#allocation5 + $0x278] sm:$0xff]
    %v346 = vld [vmem:[#allocation5 + $0x280] sm:$0xff]
    %v347 = vld [vmem:[#allocation5 + $0x288] sm:$0xff]
    %v348 = vld [vmem:[#allocation5 + $0x290] sm:$0xff]
    %v349 = vld [vmem:[#allocation5 + $0x298] sm:$0xff]
    %v350 = vld [vmem:[#allocation5 + $0x2a0] sm:$0xff]
    %v351 = vld [vmem:[#allocation5 + $0x2a8] sm:$0xff]
    %v352 = vld [vmem:[#allocation5 + $0x2b0] sm:$0xff]
    %v353 = vld [vmem:[#allocation5 + $0x2b8] sm:$0xff]
    %v354 = vld [vmem:[#allocation5 + $0x2c0] sm:$0xff]
    %v355 = vld [vmem:[#allocation5 + $0x2c8] sm:$0xff]
    %v356 = vld [vmem:[#allocation5 + $0x2d0] sm:$0xff]
    %v357 = vld [vmem:[#allocation5 + $0x2d8] sm:$0xff]
    %v358 = vld [vmem:[#allocation5 + $0x2e0] sm:$0xff]
    %v359 = vld [vmem:[#allocation5 + $0x2e8] sm:$0xff]
    %v360 = vld [vmem:[#allocation5 + $0x2f0] sm:$0xff]
    %v361 = vld [vmem:[#allocation5 + $0x2f8] sm:$0xff]
    %v362 = vld [vmem:[%s6] sm:$0x7]
    %v364 = vlaneseq
    %v365 = vshrl.u32 %v364, 7
    %v366 = vsub.s32 0, %v365
    %v367 = vrot.slane %v362, %v366
    %v368 = vlaneseq
    %v369 = vshrl.u32 %v368, 7
    %v370 = vsub.s32 1, %v369
    %v371 = vrot.slane %v362, %v370
    %v372 = vlaneseq
    %v373 = vshrl.u32 %v372, 7
    %v374 = vsub.s32 2, %v373
    %v375 = vrot.slane %v362, %v374
    %379 = vmatprep.subr.mxu0 %v267
    %380 = vmatpush1.msra.mxu0 %v266
    %381 = vmatprep.subr.mxu0 %v270
    %382 = vmatpush1.msra.mxu0 %v269
    %383 = vmatprep.subr.mxu0 %v273
    %384 = vmatpush1.msra.mxu0 %v272
    %385 = vmatprep.subr.mxu0 %v276
    %386 = vmatpush1.msra.mxu0 %v275
    %387 = vmatprep.subr.mxu0 %v279
    %388 = vmatpush1.msra.mxu0 %v278
    %389 = vmatprep.subr.mxu0 %v282
    %390 = vmatpush1.msra.mxu0 %v281
    %391 = vmatprep.subr.mxu0 %v285
    %392 = vmatpush1.msra.mxu0 %v284
    %393 = vmatprep.subr.mxu0 %v288
    %394 = vmatpush1.msra.mxu0 %v287
    %395 = vmatprep.subr.mxu0 %v291
    %396 = vmatpush1.msra.mxu0 %v290
    %397 = vmatprep.subr.mxu0 %v294
    %398 = vmatpush1.msra.mxu0 %v293
    %399 = vmatprep.subr.mxu0 %v297
    %400 = vmatpush1.msra.mxu0 %v296
    %401 = vmatprep.subr.mxu0 %v300
    %402 = vmatpush1.msra.mxu0 %v299
    %403 = vmatprep.subr.mxu0 %v303
    %404 = vmatpush1.msra.mxu0 %v302
    %405 = vmatprep.subr.mxu0 %v306
    %406 = vmatpush1.msra.mxu0 %v305
    %407 = vmatprep.subr.mxu0 %v309
    %408 = vmatpush1.msra.mxu0 %v308
    %409 = vmatprep.subr.mxu0 %v312
    %410 = vmatpush1.msra.mxu0 %v311
    %411 = vmatprep.subr.mxu0 %v315
    %412 = vmatpush1.msra.mxu0 %v314
    %413 = vmatprep.subr.mxu0 %v318
    %414 = vmatpush1.msra.mxu0 %v317
    %415 = vmatprep.subr.mxu0 %v321
    %416 = vmatpush1.msra.mxu0 %v320
    %417 = vmatprep.subr.mxu0 %v324
    %418 = vmatpush1.msra.mxu0 %v323
    %419 = vmatprep.subr.mxu0 %v327
    %420 = vmatpush1.msra.mxu0 %v326
    %421 = vmatprep.subr.mxu0 %v330
    %422 = vmatpush1.msra.mxu0 %v329
    %423 = vmatprep.subr.mxu0 %v333
    %424 = vmatpush1.msra.mxu0 %v332
    %425 = vmatprep.subr.mxu0 %v336
    %426 = vmatpush1.msra.mxu0 %v335
    %427 = vmatprep.subr.mxu0 %v339
    %428 = vmatpush1.msra.mxu0 %v338
    %429 = vmatprep.subr.mxu0 %v342
    %430 = vmatpush1.msra.mxu0 %v341
    %431 = vmatprep.subr.mxu0 %v345
    %432 = vmatpush1.msra.mxu0 %v344
    %433 = vmatprep.subr.mxu0 %v348
    %434 = vmatpush1.msra.mxu0 %v347
    %435 = vmatprep.subr.mxu0 %v351
    %436 = vmatpush1.msra.mxu0 %v350
    %437 = vmatprep.subr.mxu0 %v354
    %438 = vmatpush1.msra.mxu0 %v353
    %439 = vmatprep.subr.mxu0 %v357
    %440 = vmatpush1.msra.mxu0 %v356
    %441 = vmatprep.subr.mxu0 %v360
    %442 = vmatpush1.msra.mxu0 %v359
    %443 = vmatprep.mubr.f32.mxu0 %v265
    %444 = vmatmul.mubr.f32.gmra.mrb[0].mxu0 %v264
    %v445 = vpop.f32.mrb[0].mxu0
    %v446 = vadd.f32 %v367, %v445
    %v447 = vpop.f32.mrb[0].mxu0
    %v448 = vadd.f32 %v371, %v447
    %449 = vdwg.mxu0
    %450 = vmatprep.subr.mxu0 0.0
    %451 = vmatpush1.msra.mxu0 %v268
    %452 = vmatprep.subr.mxu0 0.0
    %453 = vmatpush1.msra.mxu0 %v271
    %454 = vmatprep.subr.mxu0 0.0
    %455 = vmatpush1.msra.mxu0 %v274
    %456 = vmatprep.subr.mxu0 0.0
    %457 = vmatpush1.msra.mxu0 %v277
    %458 = vmatprep.subr.mxu0 0.0
    %459 = vmatpush1.msra.mxu0 %v280
    %460 = vmatprep.subr.mxu0 0.0
    %461 = vmatpush1.msra.mxu0 %v283
    %462 = vmatprep.subr.mxu0 0.0
    %463 = vmatpush1.msra.mxu0 %v286
    %464 = vmatprep.subr.mxu0 0.0
    %465 = vmatpush1.msra.mxu0 %v289
    %466 = vmatprep.subr.mxu0 0.0
    %467 = vmatpush1.msra.mxu0 %v292
    %468 = vmatprep.subr.mxu0 0.0
    %469 = vmatpush1.msra.mxu0 %v295
    %470 = vmatprep.subr.mxu0 0.0
    %471 = vmatpush1.msra.mxu0 %v298
    %472 = vmatprep.subr.mxu0 0.0
    %473 = vmatpush1.msra.mxu0 %v301
    %474 = vmatprep.subr.mxu0 0.0
    %475 = vmatpush1.msra.mxu0 %v304
    %476 = vmatprep.subr.mxu0 0.0
    %477 = vmatpush1.msra.mxu0 %v307
    %478 = vmatprep.subr.mxu0 0.0
    %479 = vmatpush1.msra.mxu0 %v310
    %480 = vmatprep.subr.mxu0 0.0
    %481 = vmatpush1.msra.mxu0 %v313
    %482 = vmatprep.subr.mxu0 0.0
    %483 = vmatpush1.msra.mxu0 %v316
    %484 = vmatprep.subr.mxu0 0.0
    %485 = vmatpush1.msra.mxu0 %v319
    %486 = vmatprep.subr.mxu0 0.0
    %487 = vmatpush1.msra.mxu0 %v322
    %488 = vmatprep.subr.mxu0 0.0
    %489 = vmatpush1.msra.mxu0 %v325
    %490 = vmatprep.subr.mxu0 0.0
    %491 = vmatpush1.msra.mxu0 %v328
    %492 = vmatprep.subr.mxu0 0.0
    %493 = vmatpush1.msra.mxu0 %v331
    %494 = vmatprep.subr.mxu0 0.0
    %495 = vmatpush1.msra.mxu0 %v334
    %496 = vmatprep.subr.mxu0 0.0
    %497 = vmatpush1.msra.mxu0 %v337
    %498 = vmatprep.subr.mxu0 0.0
    %499 = vmatpush1.msra.mxu0 %v340
    %500 = vmatprep.subr.mxu0 0.0
    %501 = vmatpush1.msra.mxu0 %v343
    %502 = vmatprep.subr.mxu0 0.0
    %503 = vmatpush1.msra.mxu0 %v346
    %504 = vmatprep.subr.mxu0 0.0
    %505 = vmatpush1.msra.mxu0 %v349
    %506 = vmatprep.subr.mxu0 0.0
    %507 = vmatpush1.msra.mxu0 %v352
    %508 = vmatprep.subr.mxu0 0.0
    %509 = vmatpush1.msra.mxu0 %v355
    %510 = vmatprep.subr.mxu0 0.0
    %511 = vmatpush1.msra.mxu0 %v358
    %512 = vmatprep.subr.mxu0 0.0
    %513 = vmatpush1.msra.mxu0 %v361
    %514 = vmatprep.mubr.f32.mxu0 %v265
    %515 = vmatmul.mubr.f32.gmra.mrb[0].mxu0 %v264
    %v516 = vpop.f32.mrb[0].mxu0
    %v517 = vadd.f32 %v375, %v516
    %v518 = vpop.f32.mrb[0].mxu0
    %519 = vdwg.mxu0
    %520 = vst [vmem:[#allocation7] sm:$0xff] %v446
    %521 = vst [vmem:[#allocation7 + $0x8] sm:$0xff] %v448
    %522 = vst [vmem:[#allocation7 + $0x10] sm:$0xff] %v517
    // Predicated region
    $region38: #{regressor_forward.1} parent=1 // pred_check
      _
    $region39: #{regressor_forward.1} parent=1 // pred_check_branch
      %524 = sbr.rel (0) target = $region41
    $region40: #{regressor_forward.1} parent=1 // pred_region
      %s526 = ssub.s32 384, 384
      %527 = vsyncadd [#allocation4], %s526
      %s529 = sshll.u32 [#allocation7], 4
      %s530 = int_to_ptr.vmem [resolvable:$true] %s529
      %532 = dma.vmem_to_hbm [thread:$0]  %s530, 384, %s7, [#allocation4]
    $region41: #{regressor_forward.1} parent=1 // pred_fallthru
      _
    // Predicated region
    $region42: #{regressor_forward.1} parent=1 // pred_check
      _
    $region43: #{regressor_forward.1} parent=1 // pred_check_branch
      %534 = sbr.rel (0) target = $region45
    $region44: #{regressor_forward.1} parent=1 // pred_region
      %535 = dma.done [#allocation4], 384
    $region45: #{regressor_forward.1} parent=1 // pred_fallthru
      _
    %536 = vsyncpa [#allocation3], 1
    %537 = vsyncpa [#allocation6], 1
    %538 = vsyncpa [#allocation4], 1

</llo_original>
